<compile_context>
chip_gen: v5e
topology: v5e:2x2
jax: 0.10.0
libtpu: 0.0.40
codegen_flags: <defaults>
</compile_context>

<pallas_src>
import jax
import jax.numpy as jnp
from jax.experimental import pallas as pl
from jax.experimental.pallas import tpu as pltpu


# --------------------------------------------------------------------------- #
# Kernel
# --------------------------------------------------------------------------- #
def _time_distributed_kernel(x_ref, w_ref, b_ref, o_ref):
    # x_ref: (1, In, Tn)  current (batch, time-tile) slice (original dtype)
    # w_ref: (On, In)     weight row-tile (f32 or bf16), resident when On == Out
    # b_ref: (On, 1)      bias tile (f32)
    # o_ref: (1, On, Tn)  output slice (f32)
    w = w_ref[...]
    xt = x_ref[0].astype(w.dtype)           # in-kernel cast: no extra HBM pass
    y = jnp.dot(w, xt, preferred_element_type=jnp.float32)   # MXU, f32 accum
    o_ref[0] = y + b_ref[...]               # bias broadcast over the T lanes


# --------------------------------------------------------------------------- #
# Tiling / VMEM budgeting
# --------------------------------------------------------------------------- #
def _round_up(x, m):
    return (x + m - 1) // m * m


def _vmem_budget():
    """Return (physical VMEM bytes, scoped budget for this kernel's tiles)."""
    try:
        cap = int(pltpu.get_tpu_info().vmem_capacity_bytes)
    except Exception:  # pragma: no cover - conservative fallback (v7x-sized)
        cap = 64 << 20
    return cap, int(cap * 0.65)


def _choose_tiles(In, Out, T, x_isz, w_isz, budget):
    """Pick (Out tile, T tile, #x buffers, weight-resident?) for the budget."""
    # --- Out tile: bound the weight slab so big layers still fit VMEM.
    if Out * In * w_isz <= budget // 3:
        On, w_resident = Out, True                 # whole W, single-buffered
        w_vmem = On * In * w_isz
    else:
        On = 512
        while On > 8 and 2 * On * In * w_isz > budget // 3:
            On //= 2
        On = max(On, 8)
        w_resident = False                         # W block follows the Out axis
        w_vmem = 2 * On * In * w_isz               # double-buffered

    remaining = budget - w_vmem - 2 * 2 * Out * 4  # minus (double-buffered) bias

    # --- T tile: largest lane-dense tile whose double-buffered pipeline fits.
    #     Prefer an exact divisor of T; otherwise a cdiv grid + masked last tile.
    if T <= 128:
        Tn = T                                     # full-extent block is legal
    else:
        cands = [c for c in (2048, 1024, 512, 256, 128) if c <= T]
        fitting = [c for c in cands
                   if 2 * In * c * x_isz + 2 * On * c * 4 <= remaining]
        if not fitting:
            Tn = 128
        else:
            exact = [c for c in fitting if T % c == 0]
            Tn = exact[0] if exact else fitting[0]

    # --- Optional third x buffer: hides strided-DMA latency, cheap if it fits.
    x_bufs = 3 if 3 * In * Tn * x_isz + 2 * On * Tn * 4 <= remaining else 2
    return On, Tn, x_bufs, w_resident


# --------------------------------------------------------------------------- #
# pallas_call builder + public wrapper
# --------------------------------------------------------------------------- #
def _build_call(*, B, In, Out, T, On, Tn, x_bufs, w_resident, vmem_limit, cost,
                use_pipeline_hints):
    grid = (B, pl.cdiv(Out, On), pl.cdiv(T, Tn))

    def spec(shape, index_map, mode):
        if use_pipeline_hints and mode is not None:
            return pl.BlockSpec(shape, index_map, pipeline_mode=mode)
        return pl.BlockSpec(shape, index_map)

    x_mode = pl.Buffered(x_bufs) if x_bufs != 2 else None
    res_mode = pl.Buffered(1) if w_resident else None   # constant index maps

    return pl.pallas_call(
        _time_distributed_kernel,
        out_shape=jax.ShapeDtypeStruct((B, Out, T), jnp.float32),
        grid=grid,
        in_specs=[
            spec((1, In, Tn), lambda b, o, t: (b, 0, t), x_mode),   # x slice
            spec((On, In), lambda b, o, t: (o, 0), res_mode),       # W row-tile
            spec((On, 1), lambda b, o, t: (o, 0), res_mode),        # bias tile
        ],
        out_specs=pl.BlockSpec((1, On, Tn), lambda b, o, t: (b, o, t)),
        compiler_params=pltpu.CompilerParams(
            dimension_semantics=("parallel", "parallel", "parallel"),
            vmem_limit_bytes=vmem_limit,
        ),
        cost_estimate=cost,
    )


def time_distributed_linear(x, weight, bias, *, mxu_dtype=None,
                            out_tile=None, t_tile=None):
    """TimeDistributed(nn.Linear): x (B, In, T) -> (B, Out, T), float32.

    mxu_dtype: optional MXU-input dtype (e.g. jnp.bfloat16 on v6e/v7x).  Only
    the (tiny) weight is pre-cast; the x tile is cast inside the kernel, and
    accumulation / bias add / output stay float32.  NOTE: bf16 inputs change
    numerics vs the f32 PyTorch reference; the default (None) matches exactly.
    """
    B, In, T = x.shape
    Out = weight.shape[0]

    w_dtype = jnp.float32 if mxu_dtype is None else jnp.dtype(mxu_dtype)
    w_in = weight.astype(w_dtype)                       # tiny one-time cast
    b2d = bias.reshape(Out, 1).astype(jnp.float32)
    x_isz = jnp.dtype(x.dtype).itemsize
    w_isz = jnp.dtype(w_dtype).itemsize

    cap, budget = _vmem_budget()
    On, Tn, x_bufs, w_resident = _choose_tiles(In, Out, T, x_isz, w_isz, budget)
    if out_tile is not None:
        assert out_tile == Out or out_tile % 8 == 0
        On = out_tile
    if t_tile is not None:
        assert t_tile == T or t_tile % 128 == 0
        Tn = t_tile
    w_resident = w_resident and (On == Out)
    vmem_limit = int(min(0.9 * cap, budget + (4 << 20)))

    cost = pl.CostEstimate(
        flops=2 * B * Out * In * T,
        transcendentals=0,
        bytes_accessed=int(B * In * T * x_isz + Out * In * w_isz
                           + Out * 4 + B * Out * T * 4),
    )

    kwargs = dict(B=B, In=In, Out=Out, T=T, On=On, Tn=Tn, x_bufs=x_bufs,
                  w_resident=w_resident, vmem_limit=vmem_limit, cost=cost)
    try:
        return _build_call(use_pipeline_hints=True, **kwargs)(x, w_in, b2d)
    except Exception:
        # Graceful fallback for builds where BlockSpec(pipeline_mode=...) is
        # not accepted by the TPU lowering: identical kernel, default
        # double-buffering everywhere (slightly more VMEM, same results).
        return _build_call(use_pipeline_hints=False, **kwargs)(x, w_in, b2d)


def _reference(x, weight, bias):
    return jnp.einsum("oi,bit->bot", weight, x) + bias[None, :, None]


# --------------------------------------------------------------------------- #
# Self-test
# --------------------------------------------------------------------------- #
if __name__ == "__main__":
    root = jax.random.PRNGKey(0)

    def run_check(key, B, In, Out, T, *, mxu_dtype=None, out_tile=None, tol=1e-4):
        kx, kw, kb = jax.random.split(key, 3)
        x = jax.random.normal(kx, (B, In, T), dtype=jnp.float32)
        w = jax.random.normal(kw, (Out, In), dtype=jnp.float32) * 0.1
        b = jax.random.normal(kb, (Out,), dtype=jnp.float32) * 0.1
        out = jax.block_until_ready(
            time_distributed_linear(x, w, b, mxu_dtype=mxu_dtype,
                                    out_tile=out_tile))
        ref = _reference(x, w, b)
        assert out.shape == (B, Out, T)
        assert out.dtype == jnp.float32
        assert jnp.allclose(out, ref, atol=tol, rtol=tol), \
            f"mismatch B={B} In={In} Out={Out} T={T}"

    k1, k2, k3, k4, k5 = jax.random.split(root, 5)
    # Small shapes matching the module (single full-extent T block).
    run_check(k1, 2, 32, 16, 8)
    # Lane-dense multi-tile T path (Tn = 128, three time tiles).
    run_check(k2, 2, 64, 32, 384)
    # Awkward T (not a multiple of 128): cdiv grid + masked last tile.
    run_check(k3, 2, 48, 24, 200)
    # Forced Out-tiling path (3 weight row-tiles of 16).
    run_check(k4, 2, 32, 48, 128, out_tile=16)
    # bf16 MXU inputs via in-kernel x cast; f32 accumulate (looser tolerance).
    run_check(k5, 2, 32, 16, 8, mxu_dtype=jnp.bfloat16, tol=5e-2)

    print("KERNEL_OK")
</pallas_src>

<mosaic_0001>
module attributes {stable_mosaic.version = 11 : i64} {
  func.func @_time_distributed_kernel(%arg0: i32, %arg1: i32, %arg2: i32, %arg3: memref<1x32x8xf32, #tpu.memory_space<vmem>>, %arg4: memref<16x32xf32, #tpu.memory_space<vmem>>, %arg5: memref<16x1xf32, #tpu.memory_space<vmem>>, %arg6: memref<1x16x8xf32, #tpu.memory_space<vmem>>) attributes {dimension_semantics = [#tpu.dimension_semantics<parallel>, #tpu.dimension_semantics<parallel>, #tpu.dimension_semantics<parallel>], iteration_bounds = array<i64: 2, 1, 1>, scalar_prefetch = 0 : i64, scratch_operands = 0 : i64, tpu.core_type = #tpu.core_type<tc>, window_params = [{transform_indices = @transform_0, window_bounds = array<i64: 1, 32, 8>}, {transform_indices = @transform_1, window_bounds = array<i64: 16, 32>}, {transform_indices = @transform_2, window_bounds = array<i64: 16, 1>}, {transform_indices = @transform_3, window_bounds = array<i64: 1, 16, 8>}]} {
    %c0 = arith.constant 0 : index
    %c0_0 = arith.constant 0 : index
    %0 = vector.load %arg4[%c0, %c0_0] : memref<16x32xf32, #tpu.memory_space<vmem>>, vector<16x32xf32>
    %c0_1 = arith.constant 0 : index
    %c0_2 = arith.constant 0 : index
    %c0_3 = arith.constant 0 : index
    %1 = vector.load %arg3[%c0_1, %c0_2, %c0_3] : memref<1x32x8xf32, #tpu.memory_space<vmem>>, vector<1x32x8xf32>
    %2 = vector.shape_cast %1 : vector<1x32x8xf32> to vector<32x8xf32>
    %cst = arith.constant dense<0.000000e+00> : vector<16x8xf32>
    %3 = tpu.matmul %0, %2, %cst {dimension_numbers = #tpu.dot_dimension_numbers<[1], [0], [0], [1], [0, 0, 1, 1], [], []>} : vector<16x32xf32>, vector<32x8xf32>, vector<16x8xf32> -> vector<16x8xf32>
    %c0_4 = arith.constant 0 : index
    %c0_5 = arith.constant 0 : index
    %4 = vector.load %arg5[%c0_4, %c0_5] : memref<16x1xf32, #tpu.memory_space<vmem>>, vector<16x1xf32>
    %5 = vector.broadcast %4 : vector<16x1xf32> to vector<16x8xf32>
    %6 = arith.addf %3, %5 : vector<16x8xf32>
    %c0_6 = arith.constant 0 : index
    %c0_7 = arith.constant 0 : index
    %c0_8 = arith.constant 0 : index
    %7 = vector.load %arg6[%c0_6, %c0_7, %c0_8] : memref<1x16x8xf32, #tpu.memory_space<vmem>>, vector<1x16x8xf32>
    %8 = vector.shape_cast %7 : vector<1x16x8xf32> to vector<16x8xf32>
    %9 = vector.shape_cast %6 : vector<16x8xf32> to vector<1x16x8xf32>
    tpu.vector_store %arg6[%c0_6, %c0_7, %c0_8], %9 {strides = array<i32>} : memref<1x16x8xf32, #tpu.memory_space<vmem>>, vector<1x16x8xf32>,
    return
  }
  func.func @transform_0(%arg0: i32, %arg1: i32, %arg2: i32) -> (i32, i32, i32) {
    %c0_i32 = arith.constant 0 : i32
    %c0_i32_0 = arith.constant 0 : i32
    return %arg0, %c0_i32, %arg2 : i32, i32, i32
  }
  func.func @transform_1(%arg0: i32, %arg1: i32, %arg2: i32) -> (i32, i32) {
    %c0_i32 = arith.constant 0 : i32
    %c0_i32_0 = arith.constant 0 : i32
    return %arg1, %c0_i32 : i32, i32
  }
  func.func @transform_2(%arg0: i32, %arg1: i32, %arg2: i32) -> (i32, i32) {
    %c0_i32 = arith.constant 0 : i32
    %c0_i32_0 = arith.constant 0 : i32
    return %arg1, %c0_i32 : i32, i32
  }
  func.func @transform_3(%arg0: i32, %arg1: i32, %arg2: i32) -> (i32, i32, i32) {
    %c0_i32 = arith.constant 0 : i32
    return %arg0, %arg1, %arg2 : i32, i32, i32
  }
}

</mosaic_0001>

<llo_original>
// kernel: tpu_custom_call.1
$region0: #{tpu_custom_call.1}
  #allocation0 [shape = 'u32[]', space=smem, size = 0x4, offset = 0x4, fixed_abs, tag = 'smem constant byte address 0x4 - core index']
  #allocation1 [shape = 'u32[72,128]{1,0:T(1,128)}', space=vmem, size = 0x9000, scoped, tag = 'internal scratch']
  %s0 = inlined_call_operand.vmem [shape: f32[2,32,8], index: 0, kind: input, shape index: {}]
  %s1 = inlined_call_operand.vmem [shape: f32[16,32], index: 1, kind: input, shape index: {}]
  %s2 = inlined_call_operand.vmem [shape: f32[16,1], index: 2, kind: input, shape index: {}]
  %s3 = inlined_call_operand.vmem [shape: f32[2,16,8], index: 3, kind: output, shape index: {}]
  %s4 = sld [smem:[#allocation0]]
  $region45: #{tpu_custom_call.1} parent=0
    _
  %s6 = ssub.s32 1, %s4
  %s7 = scalar_select 0, %s6, %s4
  loop: start=0, step=1, limit=4
  $region2: #{tpu_custom_call.1} parent=0 // loop_pre_header
    _
  $region3: #{tpu_custom_call.1} parent=0 // loop_header
    %s9 = sphi 0, %s13
    %p10 = scmp.ge.s32.totalorder %s9, 4
    %s16 = sphi 0, %s35
    %s17 = sphi 0, %s31
    %s18 = sphi 0, %s27
    %s19 = sphi 0, %s16
    %s20 = sphi 0, %s17
    %s21 = sphi 0, %s18
    %s22 = sphi 0, %s19
    %s23 = sphi 0, %s20
    %s24 = sphi 0, %s21
    %s40 = sphi 0, %s42
    %s43 = sphi 0, %s40
    %s44 = sphi 0, %s43
    %s60 = sphi 0, %s44
    %s66 = sphi 0, %s68
    %s69 = sphi 0, %s66
    %s70 = sphi 0, %s69
    %s86 = sphi 0, %s70
    %s92 = sphi 0, %s94
    %s95 = sphi 0, %s92
    %s96 = sphi 0, %s95
    %s112 = sphi 0, %s96
    %s122 = sphi 0, %s124
    %s125 = sphi 0, %s122
    %s126 = sphi 0, %s125
    %s142 = sphi 0, %s126
  $region4: #{tpu_custom_call.1} parent=0 // loop_header_branch
    %12 = sbr.rel (%p10) target = $region8
  $region5: #{tpu_custom_call.1} parent=0 // loop_body
    %s14 = ssub.s32 %s9, 1
    %s15 = ssub.s32 %s9, 2
    %s25 = sadd.s32 1, %s18
    %p26 = scmp.ge.s32.totalorder %s25, 1
    %s27 = scalar_select %p26, 0, %s25
    %s28 = sadd.s32 1, %s17
    %s29 = scalar_select %p26, %s28, %s17
    %p30 = scmp.ge.s32.totalorder %s29, 1
    %s31 = scalar_select %p30, 0, %s29
    %s32 = sadd.s32 1, %s16
    %s33 = scalar_select %p30, %s32, %s16
    %p34 = scmp.ge.s32.totalorder %s33, 2
    %s35 = scalar_select %p34, 0, %s33
    %s36 = ssub.s32 %s16, %s35
    %s37 = ssub.s32 %s18, %s27
    %s38 = sor.u32 %s36, %s37
    %p39 = scmp.eq.s32.totalorder %s38, 0
    %s41 = sadd.s32 %s40, 1
    %s42 = scalar_select %p39, %s40, %s41
    %p45 = pneg %p39
    %p46 = scmp.eq.s32.totalorder %s9, 1
    %p47 = por %p45, %p46
    %p48 = scmp.ne.s32.totalorder %s40, %s43
    %p49 = scmp.eq.s32.totalorder %s9, 0
    %p50 = por %p48, %p49
    %p51 = scmp.ne.s32.totalorder %s40, %s43
    %p52 = scmp.eq.s32.totalorder %s14, 1
    %p53 = por %p51, %p52
    %p54 = scmp.ne.s32.totalorder %s43, %s44
    %p55 = scmp.eq.s32.totalorder %s14, 0
    %p56 = por %p54, %p55
    %p57 = scmp.ne.s32.totalorder %s43, %s44
    %p58 = scmp.eq.s32.totalorder %s15, 1
    %p59 = por %p57, %p58
    %p61 = scmp.ne.s32.totalorder %s44, %s60
    %p62 = scmp.eq.s32.totalorder %s15, 0
    %p63 = por %p61, %p62
    %s64 = ssub.s32 %s17, %s31
    %p65 = scmp.eq.s32.totalorder %s64, 0
    %s67 = sadd.s32 %s66, 1
    %s68 = scalar_select %p65, %s66, %s67
    %p71 = pneg %p65
    %p72 = scmp.eq.s32.totalorder %s9, 1
    %p73 = por %p71, %p72
    %p74 = scmp.ne.s32.totalorder %s66, %s69
    %p75 = scmp.eq.s32.totalorder %s9, 0
    %p76 = por %p74, %p75
    %p77 = scmp.ne.s32.totalorder %s66, %s69
    %p78 = scmp.eq.s32.totalorder %s14, 1
    %p79 = por %p77, %p78
    %p80 = scmp.ne.s32.totalorder %s69, %s70
    %p81 = scmp.eq.s32.totalorder %s14, 0
    %p82 = por %p80, %p81
    %p83 = scmp.ne.s32.totalorder %s69, %s70
    %p84 = scmp.eq.s32.totalorder %s15, 1
    %p85 = por %p83, %p84
    %p87 = scmp.ne.s32.totalorder %s70, %s86
    %p88 = scmp.eq.s32.totalorder %s15, 0
    %p89 = por %p87, %p88
    %s90 = ssub.s32 %s17, %s31
    %p91 = scmp.eq.s32.totalorder %s90, 0
    %s93 = sadd.s32 %s92, 1
    %s94 = scalar_select %p91, %s92, %s93
    %p97 = pneg %p91
    %p98 = scmp.eq.s32.totalorder %s9, 1
    %p99 = por %p97, %p98
    %p100 = scmp.ne.s32.totalorder %s92, %s95
    %p101 = scmp.eq.s32.totalorder %s9, 0
    %p102 = por %p100, %p101
    %p103 = scmp.ne.s32.totalorder %s92, %s95
    %p104 = scmp.eq.s32.totalorder %s14, 1
    %p105 = por %p103, %p104
    %p106 = scmp.ne.s32.totalorder %s95, %s96
    %p107 = scmp.eq.s32.totalorder %s14, 0
    %p108 = por %p106, %p107
    %p109 = scmp.ne.s32.totalorder %s95, %s96
    %p110 = scmp.eq.s32.totalorder %s15, 1
    %p111 = por %p109, %p110
    %p113 = scmp.ne.s32.totalorder %s96, %s112
    %p114 = scmp.eq.s32.totalorder %s15, 0
    %p115 = por %p113, %p114
    %s116 = ssub.s32 %s16, %s35
    %s117 = ssub.s32 %s17, %s31
    %s118 = sor.u32 %s116, %s117
    %s119 = ssub.s32 %s18, %s27
    %s120 = sor.u32 %s118, %s119
    %p121 = scmp.eq.s32.totalorder %s120, 0
    %s123 = sadd.s32 %s122, 1
    %s124 = scalar_select %p121, %s122, %s123
    %p127 = pneg %p121
    %p128 = scmp.eq.s32.totalorder %s9, 1
    %p129 = por %p127, %p128
    %p130 = scmp.ne.s32.totalorder %s122, %s125
    %p131 = scmp.eq.s32.totalorder %s9, 0
    %p132 = por %p130, %p131
    %p133 = scmp.ne.s32.totalorder %s122, %s125
    %p134 = scmp.eq.s32.totalorder %s14, 1
    %p135 = por %p133, %p134
    %p136 = scmp.ne.s32.totalorder %s125, %s126
    %p137 = scmp.eq.s32.totalorder %s14, 0
    %p138 = por %p136, %p137
    %p139 = scmp.ne.s32.totalorder %s125, %s126
    %p140 = scmp.eq.s32.totalorder %s15, 1
    %p141 = por %p139, %p140
    %p143 = scmp.ne.s32.totalorder %s126, %s142
    %p144 = scmp.eq.s32.totalorder %s15, 0
    %p145 = por %p143, %p144
    %p146 = scmp.le.s32.totalorder 1, %s9
    %p147 = scmp.lt.s32.totalorder %s9, 3
    %p148 = pnand %p146, %p147
    %p149 = pneg %p148
    // Predicated region
    $region9: #{tpu_custom_call.1} parent=5 // pred_check
      _
    $region10: #{tpu_custom_call.1} parent=5 // pred_check_branch
      %151 = sbr.rel (%p148) target = $region12
    $region11: #{tpu_custom_call.1} parent=5 // pred_region
      %s152 = ssub.s32 %s9, 1
      // Predicated region
      $region13: #{tpu_custom_call.1} parent=11 // pred_check
        %p153 = pneg %p82
      $region14: #{tpu_custom_call.1} parent=11 // pred_check_branch
        %155 = sbr.rel (%p153) target = $region16
      $region15: #{tpu_custom_call.1} parent=11 // pred_region
        %s156 = smul.u32 2, %s20
        %p157 = scmp.lt.s32.totalorder %s156, 1
        %s158 = scalar_select %p157, %s156, 1
        %s159 = smul.addr %s158, 8
        %s160 = scalar_lea.vmem %s1, %s159
        %s161 = smul.u32 2, %s20
      $region16: #{tpu_custom_call.1} parent=11 // pred_fallthru
        _
      // Predicated region
      $region17: #{tpu_custom_call.1} parent=11 // pred_check
        %p162 = pneg %p108
      $region18: #{tpu_custom_call.1} parent=11 // pred_check_branch
        %164 = sbr.rel (%p162) target = $region20
      $region19: #{tpu_custom_call.1} parent=11 // pred_region
        %s165 = smul.u32 2, %s20
        %p166 = scmp.lt.s32.totalorder %s165, 1
        %s167 = scalar_select %p166, %s165, 1
        %s168 = smul.addr %s167, 8
        %s169 = scalar_lea.vmem %s2, %s168
        %s170 = smul.u32 2, %s20
      $region20: #{tpu_custom_call.1} parent=11 // pred_fallthru
        _
    $region12: #{tpu_custom_call.1} parent=5 // pred_fallthru
      _
    %p171 = scmp.lt.s32.totalorder %s9, 2
    // Predicated region
    $region21: #{tpu_custom_call.1} parent=5 // pred_check
      %p172 = pneg %p171
    $region22: #{tpu_custom_call.1} parent=5 // pred_check_branch
      %174 = sbr.rel (%p172) target = $region24
    $region23: #{tpu_custom_call.1} parent=5 // pred_region
      // Predicated region
      $region25: #{tpu_custom_call.1} parent=23 // pred_check
        %p175 = pneg %p50
      $region26: #{tpu_custom_call.1} parent=23 // pred_check_branch
        %177 = sbr.rel (%p175) target = $region28
      $region27: #{tpu_custom_call.1} parent=23 // pred_region
        %p178 = scmp.lt.s32.totalorder %s16, 1
        %s179 = scalar_select %p178, %s16, 1
        %p180 = scmp.lt.s32.totalorder %s18, 0
        %s181 = scalar_select %p180, %s18, 0
        %s182 = smul.addr %s179, 4
        %s183 = sadd.s32 %s181, %s182
        %s184 = smul.addr %s183, 8
        %s185 = scalar_lea.vmem %s0, %s184
      $region28: #{tpu_custom_call.1} parent=23 // pred_fallthru
        _
    $region24: #{tpu_custom_call.1} parent=5 // pred_fallthru
      _
    %p186 = scmp.le.s32.totalorder 1, %s9
    %p187 = scmp.lt.s32.totalorder %s9, 3
    %p188 = pnand %p186, %p187
    %p189 = pneg %p188
    // Predicated region
    $region29: #{tpu_custom_call.1} parent=5 // pred_check
      _
    $region30: #{tpu_custom_call.1} parent=5 // pred_check_branch
      %191 = sbr.rel (%p188) target = $region32
    $region31: #{tpu_custom_call.1} parent=5 // pred_region
      %s192 = ssub.s32 %s9, 1
      %p193 = scmp.lt.s32.totalorder %s19, 1
      %s194 = scalar_select %p193, %s19, 1
      %p195 = scmp.lt.s32.totalorder %s21, 0
      %s196 = scalar_select %p195, %s21, 0
      %s197 = smul.addr %s194, 4
      %s198 = sadd.s32 %s196, %s197
      %s199 = smul.addr %s198, 8
      %s200 = scalar_lea.vmem %s0, %s199
      %p201 = pneg %p56
      %p202 = pneg %p53
      %s203 = smul.u32 2, %s20
      %p204 = scmp.lt.s32.totalorder %s203, 1
      %s205 = scalar_select %p204, %s203, 1
      %s206 = smul.addr %s205, 8
      %s207 = scalar_lea.vmem %s1, %s206
      %p208 = pneg %p82
      %p209 = pneg %p79
      %s210 = smul.u32 2, %s20
      %p211 = scmp.lt.s32.totalorder %s210, 1
      %s212 = scalar_select %p211, %s210, 1
      %s213 = smul.addr %s212, 8
      %s214 = scalar_lea.vmem %s2, %s213
      %p215 = pneg %p108
      %p216 = pneg %p105
      %p217 = pneg %p138
      %p218 = pneg %p135
      %s219 = smul.u32 2, %s20
      %p220 = scmp.lt.s32.totalorder %s19, 1
      %s221 = scalar_select %p220, %s19, 1
      %p222 = scmp.lt.s32.totalorder %s219, 1
      %s223 = scalar_select %p222, %s219, 1
      %p224 = scmp.lt.s32.totalorder %s21, 0
      %s225 = scalar_select %p224, %s21, 0
      %s226 = sadd.s32 %s225, %s223
      %s227 = smul.addr %s221, 2
      %s228 = sadd.s32 %s226, %s227
      %s229 = smul.addr %s228, 8
      %s230 = scalar_lea.vmem %s3, %s229
      %p231 = scmp.lt.s32.totalorder %s19, 1
      %s232 = scalar_select %p231, %s19, 1
      %p233 = scmp.lt.s32.totalorder %s21, 0
      %s234 = scalar_select %p233, %s21, 0
      %s235 = smul.addr %s232, 4
      %s236 = sadd.s32 %s234, %s235
      %s237 = smul.addr %s236, 8
      %s238 = scalar_lea.vmem %s0, %s237
      %s239 = smul.u32 2, %s20
      %p240 = scmp.lt.s32.totalorder %s239, 1
      %s241 = scalar_select %p240, %s239, 1
      %s242 = smul.addr %s241, 8
      %s243 = scalar_lea.vmem %s1, %s242
      %s244 = smul.u32 2, %s20
      %s245 = smul.u32 2, %s20
      %p246 = scmp.lt.s32.totalorder %s245, 1
      %s247 = scalar_select %p246, %s245, 1
      %s248 = smul.addr %s247, 8
      %s249 = scalar_lea.vmem %s2, %s248
      %s250 = smul.u32 2, %s20
      %s251 = smul.u32 2, %s20
      %p252 = scmp.lt.s32.totalorder %s19, 1
      %s253 = scalar_select %p252, %s19, 1
      %p254 = scmp.lt.s32.totalorder %s251, 1
      %s255 = scalar_select %p254, %s251, 1
      %p256 = scmp.lt.s32.totalorder %s21, 0
      %s257 = scalar_select %p256, %s21, 0
      %s258 = sadd.s32 %s257, %s255
      %s259 = smul.addr %s253, 2
      %s260 = sadd.s32 %s258, %s259
      %s261 = smul.addr %s260, 8
      %s262 = scalar_lea.vmem %s3, %s261
      %s263 = smul.u32 2, %s20
      %v264 = vld [vmem:[%s243] sm:$0xff]
      %v265 = vld [vmem:[%s243 + $0x8] sm:$0xff]
      %v266 = vld [vmem:[%s238] sm:$0xff]
      %v267 = vld [vmem:[%s238 + $0x8] sm:$0xff]
      %v268 = vld [vmem:[%s238 + $0x10] sm:$0xff]
      %v269 = vld [vmem:[%s238 + $0x18] sm:$0xff]
      %v270 = vld [vmem:[%s249] sm:$0xff]
      %v271 = vld [vmem:[%s249 + $0x8] sm:$0xff]
      %273 = vset.pattern.permute.xlu0 0
      %274 = vperm.xlu0 %273, %v270
      %v275 = vpop.permute.xlu0 %274
      %278 = vset.pattern.permute.xlu0 0
      %279 = vperm.xlu0 %278, %v271
      %v280 = vpop.permute.xlu0 %279
      %vm282 = vcmask 261120
      %v284 = vsel %vm282, %v264, 0
      %v287 = vsel %vm282, %v265, 0
      %289 = vmatpush.msra.mxu0 0.0
      %290 = vmatpush.msra.mxu0 0.0
      %291 = vmatpush.msra.mxu0 0.0
      %292 = vmatpush.msra.mxu0 0.0
      %293 = vmatpush.msra.mxu0 0.0
      %294 = vmatpush.msra.mxu0 0.0
      %295 = vmatpush.msra.mxu0 0.0
      %296 = vmatpush.msra.mxu0 0.0
      %297 = vmatpush.msra.mxu0 0.0
      %298 = vmatpush.msra.mxu0 0.0
      %299 = vmatpush.msra.mxu0 0.0
      %300 = vmatpush.msra.mxu0 0.0
      %301 = vmatpush.msra.mxu0 %v269
      %302 = vmatpush.msra.mxu0 %v268
      %303 = vmatpush.msra.mxu0 %v267
      %304 = vmatpush.msra.mxu0 %v266
      %305 = vmatmul.f32.gmra.mxu0 %v284
      %v306 = vpop.f32.mrf.mxu0
      %v307 = vadd.f32 %v275, %v306
      %308 = vmatmul.f32.gmra.mxu0 %v287
      %v309 = vpop.f32.mrf.mxu0
      %v310 = vadd.f32 %v280, %v309
      %311 = vdwg.mxu0
      %vm312 = vcmask 64512
      %313 = vst.msk [vmem:[%s262] sm:$0xff] %vm312, %v307
      %314 = vst.msk [vmem:[%s262 + $0x8] sm:$0xff] %vm312, %v310
      %s315 = smul.u32 2, %s20
      %p316 = scmp.lt.s32.totalorder %s19, 1
      %s317 = scalar_select %p316, %s19, 1
      %p318 = scmp.lt.s32.totalorder %s315, 1
      %s319 = scalar_select %p318, %s315, 1
      %p320 = scmp.lt.s32.totalorder %s21, 0
      %s321 = scalar_select %p320, %s21, 0
      %s322 = sadd.s32 %s321, %s319
      %s323 = smul.addr %s317, 2
      %s324 = sadd.s32 %s322, %s323
      %s325 = smul.addr %s324, 8
      %s326 = scalar_lea.vmem %s3, %s325
      // Predicated region
      $region33: #{tpu_custom_call.1} parent=31 // pred_check
        %p327 = pneg %p135
      $region34: #{tpu_custom_call.1} parent=31 // pred_check_branch
        %329 = sbr.rel (%p327) target = $region36
      $region35: #{tpu_custom_call.1} parent=31 // pred_region
        %s330 = smul.u32 2, %s20
      $region36: #{tpu_custom_call.1} parent=31 // pred_fallthru
        _
    $region32: #{tpu_custom_call.1} parent=5 // pred_fallthru
      _
    %p331 = scmp.le.s32.totalorder 2, %s9
    // Predicated region
    $region37: #{tpu_custom_call.1} parent=5 // pred_check
      %p332 = pneg %p331
    $region38: #{tpu_custom_call.1} parent=5 // pred_check_branch
      %334 = sbr.rel (%p332) target = $region40
    $region39: #{tpu_custom_call.1} parent=5 // pred_region
      %s335 = ssub.s32 %s9, 2
      // Predicated region
      $region41: #{tpu_custom_call.1} parent=39 // pred_check
        %p336 = pneg %p141
      $region42: #{tpu_custom_call.1} parent=39 // pred_check_branch
        %338 = sbr.rel (%p336) target = $region44
      $region43: #{tpu_custom_call.1} parent=39 // pred_region
        %s339 = smul.u32 2, %s23
        %p340 = scmp.lt.s32.totalorder %s22, 1
        %s341 = scalar_select %p340, %s22, 1
        %p342 = scmp.lt.s32.totalorder %s339, 1
        %s343 = scalar_select %p342, %s339, 1
        %p344 = scmp.lt.s32.totalorder %s24, 0
        %s345 = scalar_select %p344, %s24, 0
        %s346 = sadd.s32 %s345, %s343
        %s347 = smul.addr %s341, 2
        %s348 = sadd.s32 %s346, %s347
        %s349 = smul.addr %s348, 8
        %s350 = scalar_lea.vmem %s3, %s349
      $region44: #{tpu_custom_call.1} parent=39 // pred_fallthru
        _
    $region40: #{tpu_custom_call.1} parent=5 // pred_fallthru
      _
  $region6: #{tpu_custom_call.1} parent=0 // loop_footer
    %s13 = sadd.s32 1, %s9
  $region7: #{tpu_custom_call.1} parent=0 // loop_footer_branch
    %8 = sbr.rel target = $region3
  $region8: #{tpu_custom_call.1} parent=0 // loop_exit
    _

</llo_original>
